<compile_context>
chip_gen: v7x
topology: tpu7x:2x2x1
jax: 0.10.0
libtpu: 0.0.40
codegen_flags: <defaults>
</compile_context>

<pallas_src>
import math

import jax
import jax.numpy as jnp
from jax.experimental import pallas as pl
from jax.experimental.pallas import tpu as pltpu

LANE = 128          # TPU lane width
SUBLANE_BF16 = 16   # bf16 packs 16 rows per vreg


def _round_up(x, m):
    return ((x + m - 1) // m) * m


def dqn_kernel(x_ref, w1_ref, b1_ref, w2_ref, b2_ref, w3_ref, b3_ref, o_ref):
    """One batch tile of the 3-layer MLP. Weights are VMEM-resident across tiles."""
    # x arrives f32 with unpadded K; cast to bf16 in VMEM just before the MXU.
    x = x_ref[...].astype(w1_ref.dtype)
    h1 = jnp.dot(x, w1_ref[...], preferred_element_type=jnp.float32)
    h1 = jnp.maximum(h1 + b1_ref[...], 0.0)
    h2 = jnp.dot(h1.astype(w2_ref.dtype), w2_ref[...],
                 preferred_element_type=jnp.float32)
    h2 = jnp.maximum(h2 + b2_ref[...], 0.0)
    o = jnp.dot(h2.astype(w3_ref.dtype), w3_ref[...],
                preferred_element_type=jnp.float32)
    o_ref[...] = (o + b3_ref[...]).astype(o_ref.dtype)


def prepare_params(params, *, compute_dtype=jnp.bfloat16):
    """One-time preprocessing (hoisted out of the per-call path):
      * cast matmul weights to bf16,
      * zero-pad layer3's output dim (and its bias) to a multiple of 128 lanes,
      * keep biases in f32 for the f32 epilogue.
    Weights are stored [in_features, out_features] (transpose of PyTorch's [out, in])."""
    n_obs, hidden = params["w1"].shape
    n_actions = params["w3"].shape[1]
    act_p = _round_up(n_actions, LANE)

    w3p = jnp.zeros((hidden, act_p), compute_dtype).at[:, :n_actions].set(
        params["w3"].astype(compute_dtype))
    b3p = jnp.zeros((1, act_p), jnp.float32).at[:, :n_actions].set(
        params["b3"].astype(jnp.float32))

    return {
        "w1": params["w1"].astype(compute_dtype),   # (n_obs, 128)  -- K left unpadded
        "b1": params["b1"].astype(jnp.float32),
        "w2": params["w2"].astype(compute_dtype),   # (128, 128)
        "b2": params["b2"].astype(jnp.float32),
        "w3": w3p,                                  # (128, act_p)
        "b3": b3p,                                  # (1, act_p)
        "n_obs": n_obs, "hidden": hidden,
        "n_actions": n_actions, "act_p": act_p,
    }


def _choose_batch_tile(B, tb):
    # Multiple of 16 for bf16 sublane packing; capped at tb (default 512).
    tb_eff = min(tb, _round_up(B, SUBLANE_BF16))
    # Produce >=2 batch tiles when B allows it so dimension_semantics=("parallel",)
    # can shard tiles across both v7x TensorCores (no-op for v5e/v6e, zero cost).
    if B > SUBLANE_BF16 and _round_up(B, tb_eff) // tb_eff < 2:
        tb_eff = min(tb_eff, _round_up((B + 1) // 2, SUBLANE_BF16))
    return tb_eff


def dqn_forward(x, prep, *, tb=512, min_pallas_batch=32, out_dtype=jnp.float32):
    """x: [B, n_observations] f32 -> Q-values [B, n_actions] (out_dtype, f32 default)."""
    B, n_obs = x.shape
    hidden, act_p = prep["hidden"], prep["act_p"]
    n_actions = prep["n_actions"]

    if B < min_pallas_batch:
        # Tiny act()/inference batches: a fused XLA dot chain beats kernel launch +
        # DMA setup at this size. Same bf16-operand / f32-accumulate math.
        cd = prep["w1"].dtype
        h1 = jnp.maximum(jnp.dot(x.astype(cd), prep["w1"],
                                 preferred_element_type=jnp.float32) + prep["b1"], 0.0)
        h2 = jnp.maximum(jnp.dot(h1.astype(cd), prep["w2"],
                                 preferred_element_type=jnp.float32) + prep["b2"], 0.0)
        o = jnp.dot(h2.astype(cd), prep["w3"],
                    preferred_element_type=jnp.float32) + prep["b3"]
        return o[:, :n_actions].astype(out_dtype)

    tb_eff = _choose_batch_tile(B, tb)
    b_pad = _round_up(B, tb_eff)
    xp = x if b_pad == B else jnp.pad(x, ((0, b_pad - B), (0, 0)))

    resident = lambda i: (0, 0)  # weights/biases: same block for every batch tile

    out_padded = pl.pallas_call(
        dqn_kernel,
        out_shape=jax.ShapeDtypeStruct((b_pad, act_p), out_dtype),
        grid=(b_pad // tb_eff,),
        in_specs=[
            pl.BlockSpec((tb_eff, n_obs), lambda i: (i, 0)),   # x tile (f32, unpadded K)
            pl.BlockSpec((n_obs, hidden), resident),           # w1
            pl.BlockSpec((1, hidden), resident),               # b1
            pl.BlockSpec((hidden, hidden), resident),          # w2
            pl.BlockSpec((1, hidden), resident),               # b2
            pl.BlockSpec((hidden, act_p), resident),           # w3
            pl.BlockSpec((1, act_p), resident),                # b3
        ],
        out_specs=pl.BlockSpec((tb_eff, act_p), lambda i: (i, 0)),
        compiler_params=pltpu.CompilerParams(
            dimension_semantics=("parallel",),  # independent batch tiles -> megacore
        ),
    )(xp, prep["w1"], prep["b1"], prep["w2"], prep["b2"], prep["w3"], prep["b3"])

    # Rows [B:] and columns [n_actions:] of out_padded are padding garbage; never
    # consume them -- they are sliced off here.
    return out_padded[:B, :n_actions]


def init_params(key, n_observations, n_actions, hidden=128):
    """PyTorch nn.Linear default init: U(-1/sqrt(fan_in), 1/sqrt(fan_in))."""
    keys = jax.random.split(key, 6)

    def linear(kw, kb, fan_in, fan_out):
        bound = 1.0 / math.sqrt(fan_in)
        w = jax.random.uniform(kw, (fan_in, fan_out), jnp.float32, -bound, bound)
        b = jax.random.uniform(kb, (1, fan_out), jnp.float32, -bound, bound)
        return w, b

    w1, b1 = linear(keys[0], keys[1], n_observations, hidden)
    w2, b2 = linear(keys[2], keys[3], hidden, hidden)
    w3, b3 = linear(keys[4], keys[5], hidden, n_actions)
    return {"w1": w1, "b1": b1, "w2": w2, "b2": b2, "w3": w3, "b3": b3}


def _reference(x, params, cast_dtype=None):
    """Pure-JAX reference. cast_dtype=bf16 replicates the kernel's operand casts."""
    def cast(a):
        return a.astype(cast_dtype) if cast_dtype is not None else a
    h1 = jnp.maximum(jnp.dot(cast(x), cast(params["w1"]),
                             preferred_element_type=jnp.float32) + params["b1"], 0.0)
    h2 = jnp.maximum(jnp.dot(cast(h1), cast(params["w2"]),
                             preferred_element_type=jnp.float32) + params["b2"], 0.0)
    return jnp.dot(cast(h2), cast(params["w3"]),
                   preferred_element_type=jnp.float32) + params["b3"]


if __name__ == "__main__":
    key = jax.random.PRNGKey(0)
    k_x, k_p, k_x2 = jax.random.split(key, 3)

    batch = 8
    n_observations = 32
    n_actions = 8

    x = jax.random.normal(k_x, (batch, n_observations), jnp.float32)
    params = init_params(k_p, n_observations, n_actions)
    prep = prepare_params(params)  # one-time: bf16 cast + layer3 lane padding

    # --- Small-shape test: force the Pallas path so the kernel itself runs. ---
    fwd_pallas = jax.jit(lambda xx: dqn_forward(xx, prep, min_pallas_batch=0))
    out = fwd_pallas(x)
    jax.block_until_ready(out)
    assert out.shape == (batch, n_actions)

    ref_bf16 = _reference(x, params, jnp.bfloat16)   # same operand casts -> tight tol
    ref_f32 = _reference(x, params)                  # full f32 -> loose tol
    assert jnp.allclose(out, ref_bf16, atol=2e-3, rtol=2e-3)
    assert jnp.allclose(out, ref_f32, atol=5e-2, rtol=5e-2)

    # --- Multi-tile / ragged-batch test: exercises batch padding + 2 parallel tiles. ---
    batch2 = 200
    x2 = jax.random.normal(k_x2, (batch2, n_observations), jnp.float32)
    fwd_default = jax.jit(lambda xx: dqn_forward(xx, prep))  # default dispatch (Pallas)
    out2 = fwd_default(x2)
    jax.block_until_ready(out2)
    assert out2.shape == (batch2, n_actions)
    assert jnp.allclose(out2, _reference(x2, params, jnp.bfloat16), atol=2e-3, rtol=2e-3)

    # --- Tiny-batch fallback path (act()/inference) matches the kernel output. ---
    out_fb = jax.jit(lambda xx: dqn_forward(xx, prep))(x)    # B=8 < min_pallas_batch
    jax.block_until_ready(out_fb)
    assert jnp.allclose(out_fb, out, atol=2e-3, rtol=2e-3)

    print("KERNEL_OK")
</pallas_src>

<mosaic_0001>
module attributes {stable_mosaic.version = 11 : i64} {
  func.func @dqn_kernel(%arg0: i32, %arg1: memref<16x32xf32, #tpu.memory_space<vmem>>, %arg2: memref<32x128xbf16, #tpu.memory_space<vmem>>, %arg3: memref<1x128xf32, #tpu.memory_space<vmem>>, %arg4: memref<128x128xbf16, #tpu.memory_space<vmem>>, %arg5: memref<1x128xf32, #tpu.memory_space<vmem>>, %arg6: memref<128x128xbf16, #tpu.memory_space<vmem>>, %arg7: memref<1x128xf32, #tpu.memory_space<vmem>>, %arg8: memref<16x128xf32, #tpu.memory_space<vmem>>) attributes {dimension_semantics = [#tpu.dimension_semantics<parallel>], iteration_bounds = array<i64: 1>, scalar_prefetch = 0 : i64, scratch_operands = 0 : i64, tpu.core_type = #tpu.core_type<tc>, window_params = [{transform_indices = @transform_0, window_bounds = array<i64: 16, 32>}, {pipeline_mode = #tpu.pipeline_mode<synchronous>, transform_indices = @transform_1, window_bounds = array<i64: 32, 128>}, {pipeline_mode = #tpu.pipeline_mode<synchronous>, transform_indices = @transform_2, window_bounds = array<i64: 1, 128>}, {pipeline_mode = #tpu.pipeline_mode<synchronous>, transform_indices = @transform_3, window_bounds = array<i64: 128, 128>}, {pipeline_mode = #tpu.pipeline_mode<synchronous>, transform_indices = @transform_4, window_bounds = array<i64: 1, 128>}, {pipeline_mode = #tpu.pipeline_mode<synchronous>, transform_indices = @transform_5, window_bounds = array<i64: 128, 128>}, {pipeline_mode = #tpu.pipeline_mode<synchronous>, transform_indices = @transform_6, window_bounds = array<i64: 1, 128>}, {transform_indices = @transform_7, window_bounds = array<i64: 16, 128>}]} {
    %c0 = arith.constant 0 : index
    %c0_0 = arith.constant 0 : index
    %0 = vector.load %arg1[%c0, %c0_0] : memref<16x32xf32, #tpu.memory_space<vmem>>, vector<16x32xf32>
    %1 = arith.truncf %0 : vector<16x32xf32> to vector<16x32xbf16>
    %c0_1 = arith.constant 0 : index
    %c0_2 = arith.constant 0 : index
    %2 = vector.load %arg2[%c0_1, %c0_2] : memref<32x128xbf16, #tpu.memory_space<vmem>>, vector<32x128xbf16>
    %cst = arith.constant dense<0.000000e+00> : vector<16x128xf32>
    %3 = tpu.matmul %1, %2, %cst {dimension_numbers = #tpu.dot_dimension_numbers<[1], [0], [0], [1], [0, 0, 1, 1], [], []>} : vector<16x32xbf16>, vector<32x128xbf16>, vector<16x128xf32> -> vector<16x128xf32>
    %c0_3 = arith.constant 0 : index
    %c0_4 = arith.constant 0 : index
    %4 = vector.load %arg3[%c0_3, %c0_4] : memref<1x128xf32, #tpu.memory_space<vmem>>, vector<1x128xf32>
    %5 = vector.broadcast %4 : vector<1x128xf32> to vector<16x128xf32>
    %6 = arith.addf %3, %5 : vector<16x128xf32>
    %cst_5 = arith.constant 0.000000e+00 : f32
    %7 = vector.broadcast %cst_5 : f32 to vector<16x128xf32>
    %8 = arith.maximumf %6, %7 : vector<16x128xf32>
    %9 = arith.truncf %8 : vector<16x128xf32> to vector<16x128xbf16>
    %c0_6 = arith.constant 0 : index
    %c0_7 = arith.constant 0 : index
    %10 = vector.load %arg4[%c0_6, %c0_7] : memref<128x128xbf16, #tpu.memory_space<vmem>>, vector<128x128xbf16>
    %cst_8 = arith.constant dense<0.000000e+00> : vector<16x128xf32>
    %11 = tpu.matmul %9, %10, %cst_8 {dimension_numbers = #tpu.dot_dimension_numbers<[1], [0], [0], [1], [0, 0, 1, 1], [], []>} : vector<16x128xbf16>, vector<128x128xbf16>, vector<16x128xf32> -> vector<16x128xf32>
    %c0_9 = arith.constant 0 : index
    %c0_10 = arith.constant 0 : index
    %12 = vector.load %arg5[%c0_9, %c0_10] : memref<1x128xf32, #tpu.memory_space<vmem>>, vector<1x128xf32>
    %13 = vector.broadcast %12 : vector<1x128xf32> to vector<16x128xf32>
    %14 = arith.addf %11, %13 : vector<16x128xf32>
    %cst_11 = arith.constant 0.000000e+00 : f32
    %15 = vector.broadcast %cst_11 : f32 to vector<16x128xf32>
    %16 = arith.maximumf %14, %15 : vector<16x128xf32>
    %17 = arith.truncf %16 : vector<16x128xf32> to vector<16x128xbf16>
    %c0_12 = arith.constant 0 : index
    %c0_13 = arith.constant 0 : index
    %18 = vector.load %arg6[%c0_12, %c0_13] : memref<128x128xbf16, #tpu.memory_space<vmem>>, vector<128x128xbf16>
    %cst_14 = arith.constant dense<0.000000e+00> : vector<16x128xf32>
    %19 = tpu.matmul %17, %18, %cst_14 {dimension_numbers = #tpu.dot_dimension_numbers<[1], [0], [0], [1], [0, 0, 1, 1], [], []>} : vector<16x128xbf16>, vector<128x128xbf16>, vector<16x128xf32> -> vector<16x128xf32>
    %c0_15 = arith.constant 0 : index
    %c0_16 = arith.constant 0 : index
    %20 = vector.load %arg7[%c0_15, %c0_16] : memref<1x128xf32, #tpu.memory_space<vmem>>, vector<1x128xf32>
    %21 = vector.broadcast %20 : vector<1x128xf32> to vector<16x128xf32>
    %22 = arith.addf %19, %21 : vector<16x128xf32>
    %c0_17 = arith.constant 0 : index
    %c0_18 = arith.constant 0 : index
    %23 = vector.load %arg8[%c0_17, %c0_18] : memref<16x128xf32, #tpu.memory_space<vmem>>, vector<16x128xf32>
    tpu.vector_store %arg8[%c0_17, %c0_18], %22 {strides = array<i32>} : memref<16x128xf32, #tpu.memory_space<vmem>>, vector<16x128xf32>,
    return
  }
  func.func @transform_0(%arg0: i32) -> (i32, i32) {
    %c0_i32 = arith.constant 0 : i32
    %c0_i32_0 = arith.constant 0 : i32
    return %arg0, %c0_i32 : i32, i32
  }
  func.func @transform_1(%arg0: i32) -> (i32, i32) {
    %c0_i32 = arith.constant 0 : i32
    %c0_i32_0 = arith.constant 0 : i32
    %c0_i32_1 = arith.constant 0 : i32
    return %c0_i32, %c0_i32_0 : i32, i32
  }
  func.func @transform_2(%arg0: i32) -> (i32, i32) {
    %c0_i32 = arith.constant 0 : i32
    %c0_i32_0 = arith.constant 0 : i32
    %c0_i32_1 = arith.constant 0 : i32
    return %c0_i32, %c0_i32_0 : i32, i32
  }
  func.func @transform_3(%arg0: i32) -> (i32, i32) {
    %c0_i32 = arith.constant 0 : i32
    %c0_i32_0 = arith.constant 0 : i32
    %c0_i32_1 = arith.constant 0 : i32
    return %c0_i32, %c0_i32_0 : i32, i32
  }
  func.func @transform_4(%arg0: i32) -> (i32, i32) {
    %c0_i32 = arith.constant 0 : i32
    %c0_i32_0 = arith.constant 0 : i32
    %c0_i32_1 = arith.constant 0 : i32
    return %c0_i32, %c0_i32_0 : i32, i32
  }
  func.func @transform_5(%arg0: i32) -> (i32, i32) {
    %c0_i32 = arith.constant 0 : i32
    %c0_i32_0 = arith.constant 0 : i32
    %c0_i32_1 = arith.constant 0 : i32
    return %c0_i32, %c0_i32_0 : i32, i32
  }
  func.func @transform_6(%arg0: i32) -> (i32, i32) {
    %c0_i32 = arith.constant 0 : i32
    %c0_i32_0 = arith.constant 0 : i32
    %c0_i32_1 = arith.constant 0 : i32
    return %c0_i32, %c0_i32_0 : i32, i32
  }
  func.func @transform_7(%arg0: i32) -> (i32, i32) {
    %c0_i32 = arith.constant 0 : i32
    %c0_i32_0 = arith.constant 0 : i32
    return %arg0, %c0_i32 : i32, i32
  }
}

</mosaic_0001>

<llo_original>
// kernel: _lambda_.1
$region0: #{_lambda_.1}
  #allocation0 [shape = 'u32[]', space=smem, size = 0x4, offset = 0x4, fixed_abs, tag = 'smem constant byte address 0x4 - core index']
  #allocation1 [shape = 'u32[144,128]{1,0:T(1,128)}', space=vmem, size = 0x12000, scoped, tag = 'internal scratch']
  %s0 = inlined_call_operand.vmem [shape: f32[16,32], index: 0, kind: input, shape index: {}]
  %s1 = inlined_call_operand.vmem [shape: bf16[32,128], index: 1, kind: input, shape index: {}]
  %s2 = inlined_call_operand.vmem [shape: f32[1,128], index: 2, kind: input, shape index: {}]
  %s3 = inlined_call_operand.hbm [shape: bf16[128,128], index: 3, kind: input, shape index: {}]
  %s4 = inlined_call_operand.vmem [shape: f32[1,128], index: 4, kind: input, shape index: {}]
  %s5 = inlined_call_operand.hbm [shape: bf16[128,128], index: 5, kind: input, shape index: {}]
  %s6 = inlined_call_operand.vmem [shape: f32[1,128], index: 6, kind: input, shape index: {}]
  %s7 = inlined_call_operand.vmem [shape: f32[16,128], index: 7, kind: output, shape index: {}]
  %s8 = sld [smem:[#allocation0]]
  $region46: #{_lambda_.1} parent=0
    _
  %s10 = ssub.s32 1, %s8
  %s11 = scalar_select 0, %s10, %s8
  $region1: #{_lambda_.1} parent=0
    #allocation2 [shape = 'u8[32768]{0}', space=vmem, size = 0x8000, scoped, tag = 'input window, operand 3, single buffered']
    #allocation3 [shape = 's32[1]{0}', space=sflag, size = 0x4, scoped, tag = 'scoped memory for _lambda_.1']
    #allocation4 [shape = 'u8[32768]{0}', space=vmem, size = 0x8000, scoped, tag = 'input window, operand 5, single buffered']
    #allocation5 [shape = 's32[1]{0}', space=sflag, size = 0x4, scoped, tag = 'scoped memory for _lambda_.1']
    %12 = vsyncpa [#allocation3], 0
    %13 = vsyncpa [#allocation5], 0
    // Predicated region
    $region2: #{_lambda_.1} parent=1 // pred_check
      _
    $region3: #{_lambda_.1} parent=1 // pred_check_branch
      %15 = sbr.rel (0) target = $region5
    $region4: #{_lambda_.1} parent=1 // pred_region
      _
    $region5: #{_lambda_.1} parent=1 // pred_fallthru
      _
    // Predicated region
    $region6: #{_lambda_.1} parent=1 // pred_check
      _
    $region7: #{_lambda_.1} parent=1 // pred_check_branch
      %17 = sbr.rel (0) target = $region9
    $region8: #{_lambda_.1} parent=1 // pred_region
      _
    $region9: #{_lambda_.1} parent=1 // pred_fallthru
      _
    // Predicated region
    $region10: #{_lambda_.1} parent=1 // pred_check
      _
    $region11: #{_lambda_.1} parent=1 // pred_check_branch
      %19 = sbr.rel (0) target = $region13
    $region12: #{_lambda_.1} parent=1 // pred_region
      _
    $region13: #{_lambda_.1} parent=1 // pred_fallthru
      _
    // Predicated region
    $region14: #{_lambda_.1} parent=1 // pred_check
      _
    $region15: #{_lambda_.1} parent=1 // pred_check_branch
      %21 = sbr.rel (0) target = $region17
    $region16: #{_lambda_.1} parent=1 // pred_region
      %s23 = ssub.s32 1024, 1024
      %24 = vsyncadd [#allocation3], %s23
      %s25 = sshll.u32 [#allocation2], 4
      %s26 = int_to_ptr.vmem [resolvable:$true] %s25
      %31 = dma.hbm_to_vmem [thread:$0]  %s3, 1024, %s26, [#allocation3], 64, 64, 4
    $region17: #{_lambda_.1} parent=1 // pred_fallthru
      _
    // Predicated region
    $region18: #{_lambda_.1} parent=1 // pred_check
      _
    $region19: #{_lambda_.1} parent=1 // pred_check_branch
      %33 = sbr.rel (0) target = $region21
    $region20: #{_lambda_.1} parent=1 // pred_region
      _
    $region21: #{_lambda_.1} parent=1 // pred_fallthru
      _
    // Predicated region
    $region22: #{_lambda_.1} parent=1 // pred_check
      _
    $region23: #{_lambda_.1} parent=1 // pred_check_branch
      %35 = sbr.rel (0) target = $region25
    $region24: #{_lambda_.1} parent=1 // pred_region
      %s37 = ssub.s32 1024, 1024
      %38 = vsyncadd [#allocation5], %s37
      %s39 = sshll.u32 [#allocation4], 4
      %s40 = int_to_ptr.vmem [resolvable:$true] %s39
      %45 = dma.hbm_to_vmem [thread:$0]  %s5, 1024, %s40, [#allocation5], 64, 64, 4
    $region25: #{_lambda_.1} parent=1 // pred_fallthru
      _
    // Predicated region
    $region26: #{_lambda_.1} parent=1 // pred_check
      _
    $region27: #{_lambda_.1} parent=1 // pred_check_branch
      %47 = sbr.rel (0) target = $region29
    $region28: #{_lambda_.1} parent=1 // pred_region
      _
    $region29: #{_lambda_.1} parent=1 // pred_fallthru
      _
    // Predicated region
    $region30: #{_lambda_.1} parent=1 // pred_check
      _
    $region31: #{_lambda_.1} parent=1 // pred_check_branch
      %49 = sbr.rel (0) target = $region33
    $region32: #{_lambda_.1} parent=1 // pred_region
      %50 = dma.done [#allocation3], 1024
    $region33: #{_lambda_.1} parent=1 // pred_fallthru
      _
    // Predicated region
    $region34: #{_lambda_.1} parent=1 // pred_check
      _
    $region35: #{_lambda_.1} parent=1 // pred_check_branch
      %52 = sbr.rel (0) target = $region37
    $region36: #{_lambda_.1} parent=1 // pred_region
      %53 = dma.done [#allocation5], 1024
    $region37: #{_lambda_.1} parent=1 // pred_fallthru
      _
    %v55 = vld [vmem:[%s0] sm:$0xff]
    %v56 = vld [vmem:[%s0 + $0x8] sm:$0xff]
    %v57 = vpack.c.bf16 %v56, %v55
    %v58 = vld [vmem:[%s1] sm:$0xf]
    %v59 = vld [vmem:[%s1 + $0x4] sm:$0xf]
    %v60 = vld [vmem:[%s1 + $0x8] sm:$0xf]
    %v61 = vld [vmem:[%s1 + $0xc] sm:$0xf]
    %v62 = vld [vmem:[%s2] sm:$0x1]
    %v64 = vlaneseq
    %v65 = vshrl.u32 %v64, 7
    %v66 = vsub.s32 0, %v65
    %v67 = vrot.slane %v62, %v66
    %v73 = vunpack.c.l.b16 %v58
    %v74 = vunpack.c.l.b16 %v59
    %v75 = vunpack.c.l.b16 %v60
    %v76 = vunpack.c.l.b16 %v61
    %v77 = vpack.c.b16 %v74, %v73
    %v78 = vpack.c.b16 %v76, %v75
    %vm81 = vcmask 261120
    %v83 = vsel %vm81, %v57, 0
    %85 = vmatprep.subr.bf16.mxu0 0
    %86 = vmatpush1.bf16.msra.mxu0 %v77
    %87 = vmatprep.subr.bf16.mxu0 0
    %88 = vmatpush1.bf16.msra.mxu0 %v78
    %89 = vmatprep.subr.bf16.mxu0 0
    %90 = vmatpush1.bf16.msra.mxu0 0
    %91 = vmatprep.subr.bf16.mxu0 0
    %92 = vmatpush1.bf16.msra.mxu0 0
    %93 = vmatprep.subr.bf16.mxu0 0
    %94 = vmatpush1.bf16.msra.mxu0 0
    %95 = vmatprep.subr.bf16.mxu0 0
    %96 = vmatpush1.bf16.msra.mxu0 0
    %97 = vmatprep.subr.bf16.mxu0 0
    %98 = vmatpush1.bf16.msra.mxu0 0
    %99 = vmatprep.subr.bf16.mxu0 0
    %100 = vmatpush1.bf16.msra.mxu0 0
    %101 = vmatprep.subr.bf16.mxu0 0
    %102 = vmatpush1.bf16.msra.mxu0 0
    %103 = vmatprep.subr.bf16.mxu0 0
    %104 = vmatpush1.bf16.msra.mxu0 0
    %105 = vmatprep.subr.bf16.mxu0 0
    %106 = vmatpush1.bf16.msra.mxu0 0
    %107 = vmatprep.subr.bf16.mxu0 0
    %108 = vmatpush1.bf16.msra.mxu0 0
    %109 = vmatprep.subr.bf16.mxu0 0
    %110 = vmatpush1.bf16.msra.mxu0 0
    %111 = vmatprep.subr.bf16.mxu0 0
    %112 = vmatpush1.bf16.msra.mxu0 0
    %113 = vmatprep.subr.bf16.mxu0 0
    %114 = vmatpush1.bf16.msra.mxu0 0
    %115 = vmatprep.subr.bf16.mxu0 0
    %116 = vmatpush1.bf16.msra.mxu0 0
    %117 = vmatprep.mubr.bf16.mxu0 0
    %118 = vmatmul.mubr.bf16.gmra.mrb[0].mxu0 %v83
    %v119 = vpop.f32.mrb[0].mxu0
    %v120 = vadd.f32 %v67, %v119
    %v121 = vpop.f32.mrb[0].mxu0
    %v122 = vpop.f32.mrb[0].mxu0
    %v123 = vadd.f32 %v67, %v122
    %v124 = vpop.f32.mrb[0].mxu0
    %125 = vdwg.mxu0
    %v126 = vmax.f32 %v120, 0.0
    %v127 = vmax.f32 %v123, 0.0
    %v128 = vpack.c.bf16 %v127, %v126
    %v129 = vld [vmem:[#allocation2] sm:$0xf]
    %v130 = vld [vmem:[#allocation2 + $0x4] sm:$0xf]
    %v131 = vld [vmem:[#allocation2 + $0x8] sm:$0xf]
    %v132 = vld [vmem:[#allocation2 + $0xc] sm:$0xf]
    %v133 = vld [vmem:[#allocation2 + $0x10] sm:$0xf]
    %v134 = vld [vmem:[#allocation2 + $0x14] sm:$0xf]
    %v135 = vld [vmem:[#allocation2 + $0x18] sm:$0xf]
    %v136 = vld [vmem:[#allocation2 + $0x1c] sm:$0xf]
    %v137 = vld [vmem:[#allocation2 + $0x20] sm:$0xf]
    %v138 = vld [vmem:[#allocation2 + $0x24] sm:$0xf]
    %v139 = vld [vmem:[#allocation2 + $0x28] sm:$0xf]
    %v140 = vld [vmem:[#allocation2 + $0x2c] sm:$0xf]
    %v141 = vld [vmem:[#allocation2 + $0x30] sm:$0xf]
    %v142 = vld [vmem:[#allocation2 + $0x34] sm:$0xf]
    %v143 = vld [vmem:[#allocation2 + $0x38] sm:$0xf]
    %v144 = vld [vmem:[#allocation2 + $0x3c] sm:$0xf]
    %v145 = vld [vmem:[%s4] sm:$0x1]
    %v147 = vlaneseq
    %v148 = vshrl.u32 %v147, 7
    %v149 = vsub.s32 0, %v148
    %v150 = vrot.slane %v145, %v149
    %v168 = vunpack.c.l.b16 %v129
    %v169 = vunpack.c.l.b16 %v130
    %v170 = vunpack.c.l.b16 %v131
    %v171 = vunpack.c.l.b16 %v132
    %v172 = vunpack.c.l.b16 %v133
    %v173 = vunpack.c.l.b16 %v134
    %v174 = vunpack.c.l.b16 %v135
    %v175 = vunpack.c.l.b16 %v136
    %v176 = vunpack.c.l.b16 %v137
    %v177 = vunpack.c.l.b16 %v138
    %v178 = vunpack.c.l.b16 %v139
    %v179 = vunpack.c.l.b16 %v140
    %v180 = vunpack.c.l.b16 %v141
    %v181 = vunpack.c.l.b16 %v142
    %v182 = vunpack.c.l.b16 %v143
    %v183 = vunpack.c.l.b16 %v144
    %v184 = vpack.c.b16 %v169, %v168
    %v185 = vpack.c.b16 %v171, %v170
    %v186 = vpack.c.b16 %v173, %v172
    %v187 = vpack.c.b16 %v175, %v174
    %v188 = vpack.c.b16 %v177, %v176
    %v189 = vpack.c.b16 %v179, %v178
    %v190 = vpack.c.b16 %v181, %v180
    %v191 = vpack.c.b16 %v183, %v182
    %200 = vmatprep.subr.bf16.mxu0 0
    %201 = vmatpush1.bf16.msra.mxu0 %v184
    %202 = vmatprep.subr.bf16.mxu0 0
    %203 = vmatpush1.bf16.msra.mxu0 %v185
    %204 = vmatprep.subr.bf16.mxu0 0
    %205 = vmatpush1.bf16.msra.mxu0 %v186
    %206 = vmatprep.subr.bf16.mxu0 0
    %207 = vmatpush1.bf16.msra.mxu0 %v187
    %208 = vmatprep.subr.bf16.mxu0 0
    %209 = vmatpush1.bf16.msra.mxu0 %v188
    %210 = vmatprep.subr.bf16.mxu0 0
    %211 = vmatpush1.bf16.msra.mxu0 %v189
    %212 = vmatprep.subr.bf16.mxu0 0
    %213 = vmatpush1.bf16.msra.mxu0 %v190
    %214 = vmatprep.subr.bf16.mxu0 0
    %215 = vmatpush1.bf16.msra.mxu0 %v191
    %216 = vmatprep.subr.bf16.mxu0 0
    %217 = vmatpush1.bf16.msra.mxu0 0
    %218 = vmatprep.subr.bf16.mxu0 0
    %219 = vmatpush1.bf16.msra.mxu0 0
    %220 = vmatprep.subr.bf16.mxu0 0
    %221 = vmatpush1.bf16.msra.mxu0 0
    %222 = vmatprep.subr.bf16.mxu0 0
    %223 = vmatpush1.bf16.msra.mxu0 0
    %224 = vmatprep.subr.bf16.mxu0 0
    %225 = vmatpush1.bf16.msra.mxu0 0
    %226 = vmatprep.subr.bf16.mxu0 0
    %227 = vmatpush1.bf16.msra.mxu0 0
    %228 = vmatprep.subr.bf16.mxu0 0
    %229 = vmatpush1.bf16.msra.mxu0 0
    %230 = vmatprep.subr.bf16.mxu0 0
    %231 = vmatpush1.bf16.msra.mxu0 0
    %232 = vmatprep.mubr.bf16.mxu0 0
    %233 = vmatmul.mubr.bf16.gmra.mrb[0].mxu0 %v128
    %v234 = vpop.f32.mrb[0].mxu0
    %v235 = vadd.f32 %v150, %v234
    %v236 = vpop.f32.mrb[0].mxu0
    %v237 = vpop.f32.mrb[0].mxu0
    %v238 = vadd.f32 %v150, %v237
    %v239 = vpop.f32.mrb[0].mxu0
    %240 = vdwg.mxu0
    %v241 = vmax.f32 %v235, 0.0
    %v242 = vmax.f32 %v238, 0.0
    %v243 = vpack.c.bf16 %v242, %v241
    %v244 = vld [vmem:[#allocation4] sm:$0xf]
    %v245 = vld [vmem:[#allocation4 + $0x4] sm:$0xf]
    %v246 = vld [vmem:[#allocation4 + $0x8] sm:$0xf]
    %v247 = vld [vmem:[#allocation4 + $0xc] sm:$0xf]
    %v248 = vld [vmem:[#allocation4 + $0x10] sm:$0xf]
    %v249 = vld [vmem:[#allocation4 + $0x14] sm:$0xf]
    %v250 = vld [vmem:[#allocation4 + $0x18] sm:$0xf]
    %v251 = vld [vmem:[#allocation4 + $0x1c] sm:$0xf]
    %v252 = vld [vmem:[#allocation4 + $0x20] sm:$0xf]
    %v253 = vld [vmem:[#allocation4 + $0x24] sm:$0xf]
    %v254 = vld [vmem:[#allocation4 + $0x28] sm:$0xf]
    %v255 = vld [vmem:[#allocation4 + $0x2c] sm:$0xf]
    %v256 = vld [vmem:[#allocation4 + $0x30] sm:$0xf]
    %v257 = vld [vmem:[#allocation4 + $0x34] sm:$0xf]
    %v258 = vld [vmem:[#allocation4 + $0x38] sm:$0xf]
    %v259 = vld [vmem:[#allocation4 + $0x3c] sm:$0xf]
    %v260 = vld [vmem:[%s6] sm:$0x1]
    %v262 = vlaneseq
    %v263 = vshrl.u32 %v262, 7
    %v264 = vsub.s32 0, %v263
    %v265 = vrot.slane %v260, %v264
    %v283 = vunpack.c.l.b16 %v244
    %v284 = vunpack.c.l.b16 %v245
    %v285 = vunpack.c.l.b16 %v246
    %v286 = vunpack.c.l.b16 %v247
    %v287 = vunpack.c.l.b16 %v248
    %v288 = vunpack.c.l.b16 %v249
    %v289 = vunpack.c.l.b16 %v250
    %v290 = vunpack.c.l.b16 %v251
    %v291 = vunpack.c.l.b16 %v252
    %v292 = vunpack.c.l.b16 %v253
    %v293 = vunpack.c.l.b16 %v254
    %v294 = vunpack.c.l.b16 %v255
    %v295 = vunpack.c.l.b16 %v256
    %v296 = vunpack.c.l.b16 %v257
    %v297 = vunpack.c.l.b16 %v258
    %v298 = vunpack.c.l.b16 %v259
    %v299 = vpack.c.b16 %v284, %v283
    %v300 = vpack.c.b16 %v286, %v285
    %v301 = vpack.c.b16 %v288, %v287
    %v302 = vpack.c.b16 %v290, %v289
    %v303 = vpack.c.b16 %v292, %v291
    %v304 = vpack.c.b16 %v294, %v293
    %v305 = vpack.c.b16 %v296, %v295
    %v306 = vpack.c.b16 %v298, %v297
    %315 = vmatprep.subr.bf16.mxu0 0
    %316 = vmatpush1.bf16.msra.mxu0 %v299
    %317 = vmatprep.subr.bf16.mxu0 0
    %318 = vmatpush1.bf16.msra.mxu0 %v300
    %319 = vmatprep.subr.bf16.mxu0 0
    %320 = vmatpush1.bf16.msra.mxu0 %v301
    %321 = vmatprep.subr.bf16.mxu0 0
    %322 = vmatpush1.bf16.msra.mxu0 %v302
    %323 = vmatprep.subr.bf16.mxu0 0
    %324 = vmatpush1.bf16.msra.mxu0 %v303
    %325 = vmatprep.subr.bf16.mxu0 0
    %326 = vmatpush1.bf16.msra.mxu0 %v304
    %327 = vmatprep.subr.bf16.mxu0 0
    %328 = vmatpush1.bf16.msra.mxu0 %v305
    %329 = vmatprep.subr.bf16.mxu0 0
    %330 = vmatpush1.bf16.msra.mxu0 %v306
    %331 = vmatprep.subr.bf16.mxu0 0
    %332 = vmatpush1.bf16.msra.mxu0 0
    %333 = vmatprep.subr.bf16.mxu0 0
    %334 = vmatpush1.bf16.msra.mxu0 0
    %335 = vmatprep.subr.bf16.mxu0 0
    %336 = vmatpush1.bf16.msra.mxu0 0
    %337 = vmatprep.subr.bf16.mxu0 0
    %338 = vmatpush1.bf16.msra.mxu0 0
    %339 = vmatprep.subr.bf16.mxu0 0
    %340 = vmatpush1.bf16.msra.mxu0 0
    %341 = vmatprep.subr.bf16.mxu0 0
    %342 = vmatpush1.bf16.msra.mxu0 0
    %343 = vmatprep.subr.bf16.mxu0 0
    %344 = vmatpush1.bf16.msra.mxu0 0
    %345 = vmatprep.subr.bf16.mxu0 0
    %346 = vmatpush1.bf16.msra.mxu0 0
    %347 = vmatprep.mubr.bf16.mxu0 0
    %348 = vmatmul.mubr.bf16.gmra.mrb[0].mxu0 %v243
    %v349 = vpop.f32.mrb[0].mxu0
    %v350 = vadd.f32 %v265, %v349
    %v351 = vpop.f32.mrb[0].mxu0
    %v352 = vpop.f32.mrb[0].mxu0
    %v353 = vadd.f32 %v265, %v352
    %v354 = vpop.f32.mrb[0].mxu0
    %355 = vdwg.mxu0
    %356 = vst [vmem:[%s7] sm:$0xff] %v350
    %357 = vst [vmem:[%s7 + $0x8] sm:$0xff] %v353
    // Predicated region
    $region38: #{_lambda_.1} parent=1 // pred_check
      _
    $region39: #{_lambda_.1} parent=1 // pred_check_branch
      %359 = sbr.rel (0) target = $region41
    $region40: #{_lambda_.1} parent=1 // pred_region
      _
    $region41: #{_lambda_.1} parent=1 // pred_fallthru
      _
    // Predicated region
    $region42: #{_lambda_.1} parent=1 // pred_check
      _
    $region43: #{_lambda_.1} parent=1 // pred_check_branch
      %361 = sbr.rel (0) target = $region45
    $region44: #{_lambda_.1} parent=1 // pred_region
      _
    $region45: #{_lambda_.1} parent=1 // pred_fallthru
      _
    %362 = vsyncpa [#allocation3], 1
    %363 = vsyncpa [#allocation5], 1

</llo_original>
